<compile_context>
chip_gen: v5e
topology: v5e:2x2
jax: 0.10.0
libtpu: 0.0.40
codegen_flags: <defaults>
</compile_context>

<pallas_src>
import jax
import jax.numpy as jnp
from jax import lax
from jax.experimental import pallas as pl
from jax.experimental.pallas import tpu as pltpu

_LANE = 128     # vreg lane width
_CH = 32        # rows per inner-loop chunk (32x128 f32 = 4 vregs per temporary)
_BR_MAX = 8192  # rows per grid block: 4 MiB f32 per input tile, 16 MiB double-buffered
_NC = 2         # leading "parallel" grid axis -> split across TCs on dual-core chips


def _round_up(x, m):
    return (x + m - 1) // m * m


def _focal_dice_kernel(total, br, spc, steps, gamma, alpha):
    """Builds the kernel. `total` is the true (unpadded) element count."""
    n_chunks = br // _CH

    def kernel(pred_ref, mask_ref, pm_ref, p_ref, m_ref, fl_ref):
        c = pl.program_id(0)   # "core" axis (parallel)
        i = pl.program_id(1)   # row-block axis (arbitrary, sequential per core)

        @pl.when(i == 0)
        def _init():
            pm_ref[...] = jnp.zeros_like(pm_ref)
            p_ref[...] = jnp.zeros_like(p_ref)
            m_ref[...] = jnp.zeros_like(m_ref)
            fl_ref[...] = jnp.zeros_like(fl_ref)

        # Virtual (unclamped) element offset of this block; used for tail masking.
        blk_elem = ((c * spc + i) * br) * _LANE

        # Local element index within one chunk; hoisted out of the chunk loop.
        local_idx = (lax.broadcasted_iota(jnp.int32, (_CH, _LANE), 0) * _LANE
                     + lax.broadcasted_iota(jnp.int32, (_CH, _LANE), 1))

        def run(masked):
            def chunk(j, carry):
                a_pm, a_p, a_m, a_fl = carry
                r0 = pl.multiple_of(j * _CH, _CH)
                x = pred_ref[pl.ds(r0, _CH), :].astype(jnp.float32)
                m = mask_ref[pl.ds(r0, _CH), :].astype(jnp.float32)
                if masked:
                    rem = total - (blk_elem + j * (_CH * _LANE))
                    valid = local_idx < rem
                    x = jnp.where(valid, x, 0.0)   # keep transcendentals finite
                    m = jnp.where(valid, m, 0.0)

                # log(sigmoid(x)) via stable softplus: 1 exp + 1 log per element;
                # log(1 - sigmoid(x)) is then a single VPU subtract.
                e = jnp.exp(-jnp.abs(x))
                denom = 1.0 + e
                r = 1.0 / denom
                p = jnp.where(x >= 0.0, r, 1.0 - r)          # == sigmoid(x)
                log_p = jnp.minimum(x, 0.0) - jnp.log(denom)  # == log(sigmoid(x))
                log_q = log_p - x                             # == log(1 - sigmoid(x))

                if gamma == 2.0:
                    q = 1.0 - p
                    w_pos = q * q                             # (1-p)**2, pure VPU
                    w_neg = p * p
                else:
                    w_pos = jnp.exp(gamma * log_q)            # (1-p)**gamma
                    w_neg = jnp.exp(gamma * log_p)            # p**gamma
                focal = -(alpha * m * w_pos * log_p
                          + (1.0 - alpha) * (1.0 - m) * w_neg * log_q)
                if masked:
                    p = jnp.where(valid, p, 0.0)
                    focal = jnp.where(valid, focal, 0.0)

                def fold(v):   # (CH,128) -> (8,128) with pure vreg adds
                    return jnp.sum(v.reshape(_CH // 8, 8, _LANE), axis=0)

                return (a_pm + fold(p * m), a_p + fold(p),
                        a_m + fold(m), a_fl + fold(focal))

            zero = jnp.zeros((8, _LANE), jnp.float32)
            a_pm, a_p, a_m, a_fl = lax.fori_loop(
                0, n_chunks, chunk, (zero, zero, zero, zero))
            pm_ref[...] += a_pm
            p_ref[...] += a_p
            m_ref[...] += a_m
            fl_ref[...] += a_fl

        # Masked path only for blocks whose window reaches past the real data.
        needs_mask = blk_elem + br * _LANE > total

        @pl.when(jnp.logical_not(needs_mask))
        def _fast():
            run(masked=False)

        @pl.when(needs_mask)
        def _tail():
            run(masked=True)

    return kernel


def focal_dice_loss(pred, mask, *, weight=20.0, gamma=2.0, alpha=0.25, smooth=1.0):
    """Pallas TPU FocalDiceloss forward: weight * FocalLoss + DiceLoss.

    pred, mask: same shape (e.g. [B, C, H, W]); globally reduced. Returns scalar f32.
    """
    assert pred.shape == mask.shape, "pred and mask should have the same shape."
    total = pred.size
    assert total >= 1
    numel = float(total)

    rows = pl.cdiv(total, _LANE)
    br = min(_BR_MAX, _round_up(rows, _CH))
    # Ensure at least one full (br,128) block exists (pads only tiny (<4 MiB) inputs
    # or a numel that is not a multiple of 128; large tensors are never copied).
    padded_rows = max(rows, br)
    steps = pl.cdiv(padded_rows, br)          # real row blocks
    spc = pl.cdiv(steps, _NC)                 # row blocks per parallel "core" slot
    assert _NC * spc * br * _LANE < 2 ** 31, "element indices must fit in int32"

    pred_flat = pred.reshape(-1)
    mask_flat = mask.reshape(-1)
    pad = padded_rows * _LANE - total
    if pad:
        # Pad values are irrelevant: the kernel masks on the true element count.
        pred_flat = jnp.pad(pred_flat, (0, pad))
        mask_flat = jnp.pad(mask_flat, (0, pad))
    pred2d = pred_flat.reshape(padded_rows, _LANE)   # native dtype, no casts
    mask2d = mask_flat.reshape(padded_rows, _LANE)   # native dtype, no casts

    kernel = _focal_dice_kernel(total, br, spc, steps, float(gamma), float(alpha))

    in_map = lambda c, i: (jnp.minimum(c * spc + i, steps - 1), 0)
    out_map = lambda c, i: (c, 0)
    part = jax.ShapeDtypeStruct((_NC * 8, _LANE), jnp.float32)

    bytes_in = (pred2d.size * pred2d.dtype.itemsize
                + mask2d.size * mask2d.dtype.itemsize)
    cost = pl.CostEstimate(
        flops=int(30 * padded_rows * _LANE),
        transcendentals=int(3 * padded_rows * _LANE),
        bytes_accessed=int(bytes_in + 4 * _NC * 8 * _LANE * 4),
    )

    pm_part, p_part, m_part, fl_part = pl.pallas_call(
        kernel,
        out_shape=(part, part, part, part),
        grid=(_NC, spc),
        in_specs=[pl.BlockSpec((br, _LANE), in_map),
                  pl.BlockSpec((br, _LANE), in_map)],
        out_specs=(pl.BlockSpec((8, _LANE), out_map),) * 4,
        compiler_params=pltpu.CompilerParams(
            dimension_semantics=("parallel", "arbitrary"),
            vmem_limit_bytes=32 * 1024 * 1024,
        ),
        cost_estimate=cost,
    )(pred2d, mask2d)

    # Combine per-core (8,128) partials; final scalar formula is tiny wrapper math.
    s_pm = jnp.sum(pm_part)    # sum(p * mask)
    s_p = jnp.sum(p_part)      # sum(p)
    s_m = jnp.sum(m_part)      # sum(mask) == num_pos
    s_fl = jnp.sum(fl_part)    # sum(loss_pos + loss_neg)

    focal = s_fl / (numel + 1e-12)             # num_pos + num_neg == numel
    dice = 1.0 - (2.0 * s_pm + smooth) / (s_p + s_m + smooth)
    return weight * focal + dice


def _reference(pred, mask, weight=20.0, gamma=2.0, alpha=0.25, smooth=1.0):
    """Pure-JAX transcription of the PyTorch FocalDiceloss forward."""
    p = jax.nn.sigmoid(pred.astype(jnp.float32))
    m = mask.astype(jnp.float32)
    num_pos = jnp.sum(m)
    num_neg = m.size - num_pos
    loss_pos = -alpha * m * (1.0 - p) ** gamma * jnp.log(p + 1e-12)
    loss_neg = -(1.0 - alpha) * (1.0 - m) * p ** gamma * jnp.log(1.0 - p + 1e-12)
    focal = (jnp.sum(loss_pos) + jnp.sum(loss_neg)) / (num_pos + num_neg + 1e-12)
    inter = jnp.sum(p * m)
    dice = 1.0 - (2.0 * inter + smooth) / (jnp.sum(p) + jnp.sum(m) + smooth)
    return weight * focal + dice


if __name__ == "__main__":
    key = jax.random.PRNGKey(0)

    def check(shape, k):
        k1, k2 = jax.random.split(k)
        pred = jax.random.normal(k1, shape, dtype=jnp.float32) * 2.0
        mask = (jax.random.uniform(k2, shape) > 0.5).astype(jnp.float32)
        out = jax.block_until_ready(focal_dice_loss(pred, mask))
        ref = _reference(pred, mask)
        assert jnp.allclose(out, ref, rtol=1e-4, atol=1e-4), (shape, out, ref)

    k1, k2, k3 = jax.random.split(key, 3)
    check((2, 1, 16, 16), k1)   # spec shape: masked tail path
    check((2, 1, 64, 64), k2)   # 128-aligned, multi-chunk inner loop, fast path
    check((2, 1, 24, 20), k3)   # numel not a multiple of 128 (wrapper pad fallback)
    print("KERNEL_OK")
</pallas_src>

<mosaic_0001>
module attributes {stable_mosaic.version = 11 : i64} {
  func.func @kernel(%arg0: i32, %arg1: i32, %arg2: memref<32x128xf32, #tpu.memory_space<vmem>>, %arg3: memref<32x128xf32, #tpu.memory_space<vmem>>, %arg4: memref<8x128xf32, #tpu.memory_space<vmem>>, %arg5: memref<8x128xf32, #tpu.memory_space<vmem>>, %arg6: memref<8x128xf32, #tpu.memory_space<vmem>>, %arg7: memref<8x128xf32, #tpu.memory_space<vmem>>) attributes {dimension_semantics = [#tpu.dimension_semantics<parallel>, #tpu.dimension_semantics<arbitrary>], iteration_bounds = array<i64: 2, 1>, scalar_prefetch = 0 : i64, scratch_operands = 0 : i64, tpu.core_type = #tpu.core_type<tc>, window_params = [{transform_indices = @transform_0, window_bounds = array<i64: 32, 128>}, {transform_indices = @transform_1, window_bounds = array<i64: 32, 128>}, {transform_indices = @transform_2, window_bounds = array<i64: 8, 128>}, {transform_indices = @transform_3, window_bounds = array<i64: 8, 128>}, {transform_indices = @transform_4, window_bounds = array<i64: 8, 128>}, {transform_indices = @transform_5, window_bounds = array<i64: 8, 128>}]} {
    %c0_i32 = arith.constant 0 : i32
    %0 = arith.cmpi eq, %arg1, %c0_i32 : i32
    %1 = arith.extui %0 : i1 to i32
    %c0_i32_0 = arith.constant 0 : i32
    %2 = arith.cmpi ne, %1, %c0_i32_0 : i32
    scf.if %2 {
      %cst = arith.constant 0.000000e+00 : f32
      %19 = vector.broadcast %cst : f32 to vector<8x128xf32>
      %c0 = arith.constant 0 : index
      %c0_4 = arith.constant 0 : index
      %20 = vector.load %arg4[%c0, %c0_4] : memref<8x128xf32, #tpu.memory_space<vmem>>, vector<8x128xf32>
      tpu.vector_store %arg4[%c0, %c0_4], %19 {strides = array<i32>} : memref<8x128xf32, #tpu.memory_space<vmem>>, vector<8x128xf32>,
      %cst_5 = arith.constant 0.000000e+00 : f32
      %21 = vector.broadcast %cst_5 : f32 to vector<8x128xf32>
      %c0_6 = arith.constant 0 : index
      %c0_7 = arith.constant 0 : index
      %22 = vector.load %arg5[%c0_6, %c0_7] : memref<8x128xf32, #tpu.memory_space<vmem>>, vector<8x128xf32>
      tpu.vector_store %arg5[%c0_6, %c0_7], %21 {strides = array<i32>} : memref<8x128xf32, #tpu.memory_space<vmem>>, vector<8x128xf32>,
      %cst_8 = arith.constant 0.000000e+00 : f32
      %23 = vector.broadcast %cst_8 : f32 to vector<8x128xf32>
      %c0_9 = arith.constant 0 : index
      %c0_10 = arith.constant 0 : index
      %24 = vector.load %arg6[%c0_9, %c0_10] : memref<8x128xf32, #tpu.memory_space<vmem>>, vector<8x128xf32>
      tpu.vector_store %arg6[%c0_9, %c0_10], %23 {strides = array<i32>} : memref<8x128xf32, #tpu.memory_space<vmem>>, vector<8x128xf32>,
      %cst_11 = arith.constant 0.000000e+00 : f32
      %25 = vector.broadcast %cst_11 : f32 to vector<8x128xf32>
      %c0_12 = arith.constant 0 : index
      %c0_13 = arith.constant 0 : index
      %26 = vector.load %arg7[%c0_12, %c0_13] : memref<8x128xf32, #tpu.memory_space<vmem>>, vector<8x128xf32>
      tpu.vector_store %arg7[%c0_12, %c0_13], %25 {strides = array<i32>} : memref<8x128xf32, #tpu.memory_space<vmem>>, vector<8x128xf32>,
    } else {
    }
    %c1_i32 = arith.constant 1 : i32
    %3 = arith.muli %arg0, %c1_i32 : i32
    %4 = arith.addi %3, %arg1 : i32
    %c32_i32 = arith.constant 32 : i32
    %5 = arith.muli %4, %c32_i32 : i32
    %c128_i32 = arith.constant 128 : i32
    %6 = arith.muli %5, %c128_i32 : i32
    %7 = tpu.iota {dimensions = array<i32: 0>} : vector<32x128xi32>
    %c128_i32_1 = arith.constant 128 : i32
    %8 = vector.broadcast %c128_i32_1 : i32 to vector<32x128xi32>
    %9 = arith.muli %7, %8 : vector<32x128xi32>
    %10 = tpu.iota {dimensions = array<i32: 1>} : vector<32x128xi32>
    %11 = arith.addi %9, %10 : vector<32x128xi32>
    %c4096_i32 = arith.constant 4096 : i32
    %12 = arith.addi %6, %c4096_i32 : i32
    %c512_i32 = arith.constant 512 : i32
    %13 = arith.cmpi sgt, %12, %c512_i32 : i32
    %true = arith.constant true
    %14 = arith.xori %13, %true : i1
    %15 = arith.extui %14 : i1 to i32
    %c0_i32_2 = arith.constant 0 : i32
    %16 = arith.cmpi ne, %15, %c0_i32_2 : i32
    scf.if %16 {
      %cst = arith.constant 0.000000e+00 : f32
      %19 = vector.broadcast %cst : f32 to vector<8x128xf32>
      %c0_i32_4 = arith.constant 0 : i32
      %c32_i32_5 = arith.constant 32 : i32
      %20 = arith.muli %c0_i32_4, %c32_i32_5 : i32
      %21 = tpu.assume_multiple %20, 32 : i32
      %22 = arith.index_cast %21 : i32 to index
      %c0 = arith.constant 0 : index
      %23 = vector.load %arg2[%22, %c0] : memref<32x128xf32, #tpu.memory_space<vmem>>, vector<32x128xf32>
      %24 = arith.index_cast %21 : i32 to index
      %c0_6 = arith.constant 0 : index
      %25 = vector.load %arg3[%24, %c0_6] : memref<32x128xf32, #tpu.memory_space<vmem>>, vector<32x128xf32>
      %26 = math.absf %23 : vector<32x128xf32>
      %cst_7 = arith.constant 0.000000e+00 : f32
      %27 = vector.broadcast %cst_7 : f32 to vector<32x128xf32>
      %28 = arith.subf %27, %26 : vector<32x128xf32>
      %29 = math.exp %28 : vector<32x128xf32>
      %cst_8 = arith.constant 1.000000e+00 : f32
      %30 = vector.broadcast %cst_8 : f32 to vector<32x128xf32>
      %31 = arith.addf %30, %29 : vector<32x128xf32>
      %cst_9 = arith.constant 1.000000e+00 : f32
      %32 = vector.broadcast %cst_9 : f32 to vector<32x128xf32>
      %33 = arith.divf %32, %31 : vector<32x128xf32>
      %cst_10 = arith.constant 0.000000e+00 : f32
      %34 = vector.broadcast %cst_10 : f32 to vector<32x128xf32>
      %35 = arith.cmpf oge, %23, %34 : vector<32x128xf32>
      %cst_11 = arith.constant 1.000000e+00 : f32
      %36 = vector.broadcast %cst_11 : f32 to vector<32x128xf32>
      %37 = arith.subf %36, %33 : vector<32x128xf32>
      %38 = arith.select %35, %33, %37 : vector<32x128xi1>, vector<32x128xf32>
      %cst_12 = arith.constant 0.000000e+00 : f32
      %39 = vector.broadcast %cst_12 : f32 to vector<32x128xf32>
      %40 = arith.minimumf %23, %39 : vector<32x128xf32>
      %41 = math.log %31 : vector<32x128xf32>
      %42 = arith.subf %40, %41 : vector<32x128xf32>
      %43 = arith.subf %42, %23 : vector<32x128xf32>
      %cst_13 = arith.constant 1.000000e+00 : f32
      %44 = vector.broadcast %cst_13 : f32 to vector<32x128xf32>
      %45 = arith.subf %44, %38 : vector<32x128xf32>
      %46 = arith.mulf %45, %45 : vector<32x128xf32>
      %47 = arith.mulf %38, %38 : vector<32x128xf32>
      %cst_14 = arith.constant 2.500000e-01 : f32
      %48 = vector.broadcast %cst_14 : f32 to vector<32x128xf32>
      %49 = arith.mulf %48, %25 : vector<32x128xf32>
      %50 = arith.mulf %49, %46 : vector<32x128xf32>
      %51 = arith.mulf %50, %42 : vector<32x128xf32>
      %cst_15 = arith.constant 1.000000e+00 : f32
      %52 = vector.broadcast %cst_15 : f32 to vector<32x128xf32>
      %53 = arith.subf %52, %25 : vector<32x128xf32>
      %cst_16 = arith.constant 7.500000e-01 : f32
      %54 = vector.broadcast %cst_16 : f32 to vector<32x128xf32>
      %55 = arith.mulf %54, %53 : vector<32x128xf32>
      %56 = arith.mulf %55, %47 : vector<32x128xf32>
      %57 = arith.mulf %56, %43 : vector<32x128xf32>
      %58 = arith.addf %51, %57 : vector<32x128xf32>
      %cst_17 = arith.constant 0.000000e+00 : f32
      %59 = vector.broadcast %cst_17 : f32 to vector<32x128xf32>
      %60 = arith.subf %59, %58 : vector<32x128xf32>
      %61 = arith.mulf %38, %25 : vector<32x128xf32>
      %62 = vector.shape_cast %61 : vector<32x128xf32> to vector<4x8x128xf32>
      %cst_18 = arith.constant dense<0.000000e+00> : vector<8x128xf32>
      %63 = vector.multi_reduction <add>, %62, %cst_18 [0] : vector<4x8x128xf32> to vector<8x128xf32>
      %64 = arith.addf %19, %63 : vector<8x128xf32>
      %65 = vector.shape_cast %38 : vector<32x128xf32> to vector<4x8x128xf32>
      %cst_19 = arith.constant dense<0.000000e+00> : vector<8x128xf32>
      %66 = vector.multi_reduction <add>, %65, %cst_19 [0] : vector<4x8x128xf32> to vector<8x128xf32>
      %67 = arith.addf %19, %66 : vector<8x128xf32>
      %68 = vector.shape_cast %25 : vector<32x128xf32> to vector<4x8x128xf32>
      %cst_20 = arith.constant dense<0.000000e+00> : vector<8x128xf32>
      %69 = vector.multi_reduction <add>, %68, %cst_20 [0] : vector<4x8x128xf32> to vector<8x128xf32>
      %70 = arith.addf %19, %69 : vector<8x128xf32>
      %71 = vector.shape_cast %60 : vector<32x128xf32> to vector<4x8x128xf32>
      %cst_21 = arith.constant dense<0.000000e+00> : vector<8x128xf32>
      %72 = vector.multi_reduction <add>, %71, %cst_21 [0] : vector<4x8x128xf32> to vector<8x128xf32>
      %73 = arith.addf %19, %72 : vector<8x128xf32>
      %c1_i32_22 = arith.constant 1 : i32
      %c0_23 = arith.constant 0 : index
      %c0_24 = arith.constant 0 : index
      %74 = vector.load %arg4[%c0_23, %c0_24] : memref<8x128xf32, #tpu.memory_space<vmem>>, vector<8x128xf32>
      %75 = arith.addf %74, %64 : vector<8x128xf32>
      %c0_25 = arith.constant 0 : index
      %c0_26 = arith.constant 0 : index
      %76 = vector.load %arg4[%c0_25, %c0_26] : memref<8x128xf32, #tpu.memory_space<vmem>>, vector<8x128xf32>
      tpu.vector_store %arg4[%c0_25, %c0_26], %75 {strides = array<i32>} : memref<8x128xf32, #tpu.memory_space<vmem>>, vector<8x128xf32>,
      %c0_27 = arith.constant 0 : index
      %c0_28 = arith.constant 0 : index
      %77 = vector.load %arg5[%c0_27, %c0_28] : memref<8x128xf32, #tpu.memory_space<vmem>>, vector<8x128xf32>
      %78 = arith.addf %77, %67 : vector<8x128xf32>
      %c0_29 = arith.constant 0 : index
      %c0_30 = arith.constant 0 : index
      %79 = vector.load %arg5[%c0_29, %c0_30] : memref<8x128xf32, #tpu.memory_space<vmem>>, vector<8x128xf32>
      tpu.vector_store %arg5[%c0_29, %c0_30], %78 {strides = array<i32>} : memref<8x128xf32, #tpu.memory_space<vmem>>, vector<8x128xf32>,
      %c0_31 = arith.constant 0 : index
      %c0_32 = arith.constant 0 : index
      %80 = vector.load %arg6[%c0_31, %c0_32] : memref<8x128xf32, #tpu.memory_space<vmem>>, vector<8x128xf32>
      %81 = arith.addf %80, %70 : vector<8x128xf32>
      %c0_33 = arith.constant 0 : index
      %c0_34 = arith.constant 0 : index
      %82 = vector.load %arg6[%c0_33, %c0_34] : memref<8x128xf32, #tpu.memory_space<vmem>>, vector<8x128xf32>
      tpu.vector_store %arg6[%c0_33, %c0_34], %81 {strides = array<i32>} : memref<8x128xf32, #tpu.memory_space<vmem>>, vector<8x128xf32>,
      %c0_35 = arith.constant 0 : index
      %c0_36 = arith.constant 0 : index
      %83 = vector.load %arg7[%c0_35, %c0_36] : memref<8x128xf32, #tpu.memory_space<vmem>>, vector<8x128xf32>
      %84 = arith.addf %83, %73 : vector<8x128xf32>
      %c0_37 = arith.constant 0 : index
      %c0_38 = arith.constant 0 : index
      %85 = vector.load %arg7[%c0_37, %c0_38] : memref<8x128xf32, #tpu.memory_space<vmem>>, vector<8x128xf32>
      tpu.vector_store %arg7[%c0_37, %c0_38], %84 {strides = array<i32>} : memref<8x128xf32, #tpu.memory_space<vmem>>, vector<8x128xf32>,
    } else {
    }
    %17 = arith.extui %13 : i1 to i32
    %c0_i32_3 = arith.constant 0 : i32
    %18 = arith.cmpi ne, %17, %c0_i32_3 : i32
    scf.if %18 {
      %cst = arith.constant 0.000000e+00 : f32
      %19 = vector.broadcast %cst : f32 to vector<8x128xf32>
      %c0_i32_4 = arith.constant 0 : i32
      %c32_i32_5 = arith.constant 32 : i32
      %20 = arith.muli %c0_i32_4, %c32_i32_5 : i32
      %21 = tpu.assume_multiple %20, 32 : i32
      %22 = arith.index_cast %21 : i32 to index
      %c0 = arith.constant 0 : index
      %23 = vector.load %arg2[%22, %c0] : memref<32x128xf32, #tpu.memory_space<vmem>>, vector<32x128xf32>
      %24 = arith.index_cast %21 : i32 to index
      %c0_6 = arith.constant 0 : index
      %25 = vector.load %arg3[%24, %c0_6] : memref<32x128xf32, #tpu.memory_space<vmem>>, vector<32x128xf32>
      %c4096_i32_7 = arith.constant 4096 : i32
      %26 = arith.muli %c0_i32_4, %c4096_i32_7 : i32
      %27 = arith.addi %6, %26 : i32
      %c512_i32_8 = arith.constant 512 : i32
      %28 = arith.subi %c512_i32_8, %27 : i32
      %29 = vector.broadcast %28 : i32 to vector<32x128xi32>
      %30 = arith.cmpi slt, %11, %29 : vector<32x128xi32>
      %cst_9 = arith.constant 0.000000e+00 : f32
      %31 = vector.broadcast %cst_9 : f32 to vector<32x128xf32>
      %32 = arith.select %30, %23, %31 : vector<32x128xi1>, vector<32x128xf32>
      %cst_10 = arith.constant 0.000000e+00 : f32
      %33 = vector.broadcast %cst_10 : f32 to vector<32x128xf32>
      %34 = arith.select %30, %25, %33 : vector<32x128xi1>, vector<32x128xf32>
      %35 = math.absf %32 : vector<32x128xf32>
      %cst_11 = arith.constant 0.000000e+00 : f32
      %36 = vector.broadcast %cst_11 : f32 to vector<32x128xf32>
      %37 = arith.subf %36, %35 : vector<32x128xf32>
      %38 = math.exp %37 : vector<32x128xf32>
      %cst_12 = arith.constant 1.000000e+00 : f32
      %39 = vector.broadcast %cst_12 : f32 to vector<32x128xf32>
      %40 = arith.addf %39, %38 : vector<32x128xf32>
      %cst_13 = arith.constant 1.000000e+00 : f32
      %41 = vector.broadcast %cst_13 : f32 to vector<32x128xf32>
      %42 = arith.divf %41, %40 : vector<32x128xf32>
      %cst_14 = arith.constant 0.000000e+00 : f32
      %43 = vector.broadcast %cst_14 : f32 to vector<32x128xf32>
      %44 = arith.cmpf oge, %32, %43 : vector<32x128xf32>
      %cst_15 = arith.constant 1.000000e+00 : f32
      %45 = vector.broadcast %cst_15 : f32 to vector<32x128xf32>
      %46 = arith.subf %45, %42 : vector<32x128xf32>
      %47 = arith.select %44, %42, %46 : vector<32x128xi1>, vector<32x128xf32>
      %cst_16 = arith.constant 0.000000e+00 : f32
      %48 = vector.broadcast %cst_16 : f32 to vector<32x128xf32>
      %49 = arith.minimumf %32, %48 : vector<32x128xf32>
      %50 = math.log %40 : vector<32x128xf32>
      %51 = arith.subf %49, %50 : vector<32x128xf32>
      %52 = arith.subf %51, %32 : vector<32x128xf32>
      %cst_17 = arith.constant 1.000000e+00 : f32
      %53 = vector.broadcast %cst_17 : f32 to vector<32x128xf32>
      %54 = arith.subf %53, %47 : vector<32x128xf32>
      %55 = arith.mulf %54, %54 : vector<32x128xf32>
      %56 = arith.mulf %47, %47 : vector<32x128xf32>
      %cst_18 = arith.constant 2.500000e-01 : f32
      %57 = vector.broadcast %cst_18 : f32 to vector<32x128xf32>
      %58 = arith.mulf %57, %34 : vector<32x128xf32>
      %59 = arith.mulf %58, %55 : vector<32x128xf32>
      %60 = arith.mulf %59, %51 : vector<32x128xf32>
      %cst_19 = arith.constant 1.000000e+00 : f32
      %61 = vector.broadcast %cst_19 : f32 to vector<32x128xf32>
      %62 = arith.subf %61, %34 : vector<32x128xf32>
      %cst_20 = arith.constant 7.500000e-01 : f32
      %63 = vector.broadcast %cst_20 : f32 to vector<32x128xf32>
      %64 = arith.mulf %63, %62 : vector<32x128xf32>
      %65 = arith.mulf %64, %56 : vector<32x128xf32>
      %66 = arith.mulf %65, %52 : vector<32x128xf32>
      %67 = arith.addf %60, %66 : vector<32x128xf32>
      %cst_21 = arith.constant 0.000000e+00 : f32
      %68 = vector.broadcast %cst_21 : f32 to vector<32x128xf32>
      %69 = arith.subf %68, %67 : vector<32x128xf32>
      %cst_22 = arith.constant 0.000000e+00 : f32
      %70 = vector.broadcast %cst_22 : f32 to vector<32x128xf32>
      %71 = arith.select %30, %47, %70 : vector<32x128xi1>, vector<32x128xf32>
      %cst_23 = arith.constant 0.000000e+00 : f32
      %72 = vector.broadcast %cst_23 : f32 to vector<32x128xf32>
      %73 = arith.select %30, %69, %72 : vector<32x128xi1>, vector<32x128xf32>
      %74 = arith.mulf %71, %34 : vector<32x128xf32>
      %75 = vector.shape_cast %74 : vector<32x128xf32> to vector<4x8x128xf32>
      %cst_24 = arith.constant dense<0.000000e+00> : vector<8x128xf32>
      %76 = vector.multi_reduction <add>, %75, %cst_24 [0] : vector<4x8x128xf32> to vector<8x128xf32>
      %77 = arith.addf %19, %76 : vector<8x128xf32>
      %78 = vector.shape_cast %71 : vector<32x128xf32> to vector<4x8x128xf32>
      %cst_25 = arith.constant dense<0.000000e+00> : vector<8x128xf32>
      %79 = vector.multi_reduction <add>, %78, %cst_25 [0] : vector<4x8x128xf32> to vector<8x128xf32>
      %80 = arith.addf %19, %79 : vector<8x128xf32>
      %81 = vector.shape_cast %34 : vector<32x128xf32> to vector<4x8x128xf32>
      %cst_26 = arith.constant dense<0.000000e+00> : vector<8x128xf32>
      %82 = vector.multi_reduction <add>, %81, %cst_26 [0] : vector<4x8x128xf32> to vector<8x128xf32>
      %83 = arith.addf %19, %82 : vector<8x128xf32>
      %84 = vector.shape_cast %73 : vector<32x128xf32> to vector<4x8x128xf32>
      %cst_27 = arith.constant dense<0.000000e+00> : vector<8x128xf32>
      %85 = vector.multi_reduction <add>, %84, %cst_27 [0] : vector<4x8x128xf32> to vector<8x128xf32>
      %86 = arith.addf %19, %85 : vector<8x128xf32>
      %c1_i32_28 = arith.constant 1 : i32
      %c0_29 = arith.constant 0 : index
      %c0_30 = arith.constant 0 : index
      %87 = vector.load %arg4[%c0_29, %c0_30] : memref<8x128xf32, #tpu.memory_space<vmem>>, vector<8x128xf32>
      %88 = arith.addf %87, %77 : vector<8x128xf32>
      %c0_31 = arith.constant 0 : index
      %c0_32 = arith.constant 0 : index
      %89 = vector.load %arg4[%c0_31, %c0_32] : memref<8x128xf32, #tpu.memory_space<vmem>>, vector<8x128xf32>
      tpu.vector_store %arg4[%c0_31, %c0_32], %88 {strides = array<i32>} : memref<8x128xf32, #tpu.memory_space<vmem>>, vector<8x128xf32>,
      %c0_33 = arith.constant 0 : index
      %c0_34 = arith.constant 0 : index
      %90 = vector.load %arg5[%c0_33, %c0_34] : memref<8x128xf32, #tpu.memory_space<vmem>>, vector<8x128xf32>
      %91 = arith.addf %90, %80 : vector<8x128xf32>
      %c0_35 = arith.constant 0 : index
      %c0_36 = arith.constant 0 : index
      %92 = vector.load %arg5[%c0_35, %c0_36] : memref<8x128xf32, #tpu.memory_space<vmem>>, vector<8x128xf32>
      tpu.vector_store %arg5[%c0_35, %c0_36], %91 {strides = array<i32>} : memref<8x128xf32, #tpu.memory_space<vmem>>, vector<8x128xf32>,
      %c0_37 = arith.constant 0 : index
      %c0_38 = arith.constant 0 : index
      %93 = vector.load %arg6[%c0_37, %c0_38] : memref<8x128xf32, #tpu.memory_space<vmem>>, vector<8x128xf32>
      %94 = arith.addf %93, %83 : vector<8x128xf32>
      %c0_39 = arith.constant 0 : index
      %c0_40 = arith.constant 0 : index
      %95 = vector.load %arg6[%c0_39, %c0_40] : memref<8x128xf32, #tpu.memory_space<vmem>>, vector<8x128xf32>
      tpu.vector_store %arg6[%c0_39, %c0_40], %94 {strides = array<i32>} : memref<8x128xf32, #tpu.memory_space<vmem>>, vector<8x128xf32>,
      %c0_41 = arith.constant 0 : index
      %c0_42 = arith.constant 0 : index
      %96 = vector.load %arg7[%c0_41, %c0_42] : memref<8x128xf32, #tpu.memory_space<vmem>>, vector<8x128xf32>
      %97 = arith.addf %96, %86 : vector<8x128xf32>
      %c0_43 = arith.constant 0 : index
      %c0_44 = arith.constant 0 : index
      %98 = vector.load %arg7[%c0_43, %c0_44] : memref<8x128xf32, #tpu.memory_space<vmem>>, vector<8x128xf32>
      tpu.vector_store %arg7[%c0_43, %c0_44], %97 {strides = array<i32>} : memref<8x128xf32, #tpu.memory_space<vmem>>, vector<8x128xf32>,
    } else {
    }
    return
  }
  func.func @transform_0(%arg0: i32, %arg1: i32) -> (i32, i32) {
    %c1_i32 = arith.constant 1 : i32
    %0 = arith.muli %arg0, %c1_i32 : i32
    %1 = arith.addi %0, %arg1 : i32
    %c0_i32 = arith.constant 0 : i32
    %2 = arith.minsi %1, %c0_i32 : i32
    %c0_i32_0 = arith.constant 0 : i32
    %c0_i32_1 = arith.constant 0 : i32
    return %2, %c0_i32_0 : i32, i32
  }
  func.func @transform_1(%arg0: i32, %arg1: i32) -> (i32, i32) {
    %c1_i32 = arith.constant 1 : i32
    %0 = arith.muli %arg0, %c1_i32 : i32
    %1 = arith.addi %0, %arg1 : i32
    %c0_i32 = arith.constant 0 : i32
    %2 = arith.minsi %1, %c0_i32 : i32
    %c0_i32_0 = arith.constant 0 : i32
    %c0_i32_1 = arith.constant 0 : i32
    return %2, %c0_i32_0 : i32, i32
  }
  func.func @transform_2(%arg0: i32, %arg1: i32) -> (i32, i32) {
    %c0_i32 = arith.constant 0 : i32
    %c0_i32_0 = arith.constant 0 : i32
    return %arg0, %c0_i32 : i32, i32
  }
  func.func @transform_3(%arg0: i32, %arg1: i32) -> (i32, i32) {
    %c0_i32 = arith.constant 0 : i32
    %c0_i32_0 = arith.constant 0 : i32
    return %arg0, %c0_i32 : i32, i32
  }
  func.func @transform_4(%arg0: i32, %arg1: i32) -> (i32, i32) {
    %c0_i32 = arith.constant 0 : i32
    %c0_i32_0 = arith.constant 0 : i32
    return %arg0, %c0_i32 : i32, i32
  }
  func.func @transform_5(%arg0: i32, %arg1: i32) -> (i32, i32) {
    %c0_i32 = arith.constant 0 : i32
    %c0_i32_0 = arith.constant 0 : i32
    return %arg0, %c0_i32 : i32, i32
  }
}

</mosaic_0001>

<llo_original>
// kernel: tpu_custom_call.1
$region0: #{tpu_custom_call.1}
  #allocation0 [shape = 'u32[]', space=smem, size = 0x4, offset = 0x4, fixed_abs, tag = 'smem constant byte address 0x4 - core index']
  #allocation1 [shape = 'u32[72,128]{1,0:T(1,128)}', space=vmem, size = 0x9000, scoped, tag = 'internal scratch']
  %s0 = inlined_call_operand.hbm [shape: f32[32,128], index: 0, kind: input, shape index: {}]
  %s1 = inlined_call_operand.hbm [shape: f32[32,128], index: 1, kind: input, shape index: {}]
  %s2 = inlined_call_operand.hbm [shape: f32[16,128], index: 2, kind: output, shape index: {0}]
  %s3 = inlined_call_operand.hbm [shape: f32[16,128], index: 3, kind: output, shape index: {1}]
  %s4 = inlined_call_operand.hbm [shape: f32[16,128], index: 4, kind: output, shape index: {2}]
  %s5 = inlined_call_operand.hbm [shape: f32[16,128], index: 5, kind: output, shape index: {3}]
  %6 = xla_tuple %s2, %s3, %s4, %s5
  %s7 = sld [smem:[#allocation0]]
  $region85: #{tpu_custom_call.1} parent=0
    _
  %s9 = ssub.s32 1, %s7
  %s10 = scalar_select 0, %s9, %s7
  $region1: #{tpu_custom_call.1} parent=0
    #allocation2 [shape = 'u8[32768]{0}', space=vmem, size = 0x8000, scoped, tag = 'input window, operand 0']
    #allocation3 [shape = 's32[2]{0}', space=sflag, size = 0x8, scoped, tag = 'scoped memory for tpu_custom_call.1']
    #allocation4 [shape = 's32[2]{0}', space=sflag, size = 0x8, scoped, tag = 'scoped memory for tpu_custom_call.1']
    #allocation5 [shape = 'u8[32768]{0}', space=vmem, size = 0x8000, scoped, tag = 'input window, operand 1']
    #allocation6 [shape = 's32[2]{0}', space=sflag, size = 0x8, scoped, tag = 'scoped memory for tpu_custom_call.1']
    #allocation7 [shape = 'u8[8192]{0}', space=vmem, size = 0x2000, scoped, tag = 'output window, operand 0']
    #allocation8 [shape = 'u8[8192]{0}', space=vmem, size = 0x2000, scoped, tag = 'output window, operand 1']
    #allocation9 [shape = 's32[2]{0}', space=sflag, size = 0x8, scoped, tag = 'scoped memory for tpu_custom_call.1']
    #allocation10 [shape = 'u8[8192]{0}', space=vmem, size = 0x2000, scoped, tag = 'output window, operand 2']
    #allocation11 [shape = 'u8[8192]{0}', space=vmem, size = 0x2000, scoped, tag = 'output window, operand 3']
    #allocation12 [shape = 's32[2]{0}', space=sflag, size = 0x8, scoped, tag = 'scoped memory for tpu_custom_call.1']
    %11 = vsyncpa [#allocation3], 0
    %s12 = scalar_lea.sflag [#allocation3], 1
    %13 = vsyncpa %s12, 0
    %14 = vsyncpa [#allocation6], 0
    %s15 = scalar_lea.sflag [#allocation6], 1
    %16 = vsyncpa %s15, 0
    %17 = vsyncpa [#allocation4], 0
    %s18 = scalar_lea.sflag [#allocation4], 1
    %19 = vsyncpa %s18, 0
    %20 = vsyncpa [#allocation9], 0
    %s21 = scalar_lea.sflag [#allocation9], 1
    %22 = vsyncpa %s21, 0
    %23 = vsyncpa [#allocation12], 0
    %s24 = scalar_lea.sflag [#allocation12], 1
    %25 = vsyncpa %s24, 0
    loop: start=0, step=1, limit=4
    $region2: #{tpu_custom_call.1} parent=1 // loop_pre_header
      _
    $region3: #{tpu_custom_call.1} parent=1 // loop_header
      %s27 = sphi 0, %s31
      %p28 = scmp.ge.s32.totalorder %s27, 4
      %s34 = sphi 0, %s46
      %s35 = sphi 0, %s42
      %s36 = sphi 0, %s34
      %s37 = sphi 0, %s35
      %s38 = sphi 0, %s36
      %s39 = sphi 0, %s37
      %s55 = sphi 0, %s57
      %s58 = sphi 0, %s55
      %s59 = sphi 0, %s58
      %s75 = sphi 0, %s59
      %s87 = sphi 0, %s89
      %s90 = sphi 0, %s87
      %s91 = sphi 0, %s90
      %s107 = sphi 0, %s91
      %s113 = sphi 0, %s115
      %s116 = sphi 0, %s113
      %s117 = sphi 0, %s116
      %s133 = sphi 0, %s117
      %s139 = sphi 0, %s141
      %s142 = sphi 0, %s139
      %s143 = sphi 0, %s142
      %s159 = sphi 0, %s143
      %s165 = sphi 0, %s167
      %s168 = sphi 0, %s165
      %s169 = sphi 0, %s168
      %s185 = sphi 0, %s169
      %s191 = sphi 0, %s193
      %s194 = sphi 0, %s191
      %s195 = sphi 0, %s194
      %s211 = sphi 0, %s195
    $region4: #{tpu_custom_call.1} parent=1 // loop_header_branch
      %30 = sbr.rel (%p28) target = $region8
    $region5: #{tpu_custom_call.1} parent=1 // loop_body
      %s32 = ssub.s32 %s27, 1
      %s33 = ssub.s32 %s27, 2
      %s40 = sadd.s32 1, %s35
      %p41 = scmp.ge.s32.totalorder %s40, 1
      %s42 = scalar_select %p41, 0, %s40
      %s43 = sadd.s32 1, %s34
      %s44 = scalar_select %p41, %s43, %s34
      %p45 = scmp.ge.s32.totalorder %s44, 2
      %s46 = scalar_select %p45, 0, %s44
      %s47 = sadd.s32 %s34, %s35
      %p48 = scmp.lt.s32.totalorder %s47, 0
      %s49 = scalar_select %p48, %s47, 0
      %s50 = sadd.s32 %s46, %s42
      %p51 = scmp.lt.s32.totalorder %s50, 0
      %s52 = scalar_select %p51, %s50, 0
      %s53 = ssub.s32 %s49, %s52
      %p54 = scmp.eq.s32.totalorder %s53, 0
      %s56 = sadd.s32 %s55, 1
      %s57 = scalar_select %p54, %s55, %s56
      %p60 = pneg %p54
      %p61 = scmp.eq.s32.totalorder %s27, 1
      %p62 = por %p60, %p61
      %p63 = scmp.ne.s32.totalorder %s55, %s58
      %p64 = scmp.eq.s32.totalorder %s27, 0
      %p65 = por %p63, %p64
      %p66 = scmp.ne.s32.totalorder %s55, %s58
      %p67 = scmp.eq.s32.totalorder %s32, 1
      %p68 = por %p66, %p67
      %p69 = scmp.ne.s32.totalorder %s58, %s59
      %p70 = scmp.eq.s32.totalorder %s32, 0
      %p71 = por %p69, %p70
      %p72 = scmp.ne.s32.totalorder %s58, %s59
      %p73 = scmp.eq.s32.totalorder %s33, 1
      %p74 = por %p72, %p73
      %p76 = scmp.ne.s32.totalorder %s59, %s75
      %p77 = scmp.eq.s32.totalorder %s33, 0
      %p78 = por %p76, %p77
      %s79 = sadd.s32 %s34, %s35
      %p80 = scmp.lt.s32.totalorder %s79, 0
      %s81 = scalar_select %p80, %s79, 0
      %s82 = sadd.s32 %s46, %s42
      %p83 = scmp.lt.s32.totalorder %s82, 0
      %s84 = scalar_select %p83, %s82, 0
      %s85 = ssub.s32 %s81, %s84
      %p86 = scmp.eq.s32.totalorder %s85, 0
      %s88 = sadd.s32 %s87, 1
      %s89 = scalar_select %p86, %s87, %s88
      %p92 = pneg %p86
      %p93 = scmp.eq.s32.totalorder %s27, 1
      %p94 = por %p92, %p93
      %p95 = scmp.ne.s32.totalorder %s87, %s90
      %p96 = scmp.eq.s32.totalorder %s27, 0
      %p97 = por %p95, %p96
      %p98 = scmp.ne.s32.totalorder %s87, %s90
      %p99 = scmp.eq.s32.totalorder %s32, 1
      %p100 = por %p98, %p99
      %p101 = scmp.ne.s32.totalorder %s90, %s91
      %p102 = scmp.eq.s32.totalorder %s32, 0
      %p103 = por %p101, %p102
      %p104 = scmp.ne.s32.totalorder %s90, %s91
      %p105 = scmp.eq.s32.totalorder %s33, 1
      %p106 = por %p104, %p105
      %p108 = scmp.ne.s32.totalorder %s91, %s107
      %p109 = scmp.eq.s32.totalorder %s33, 0
      %p110 = por %p108, %p109
      %s111 = ssub.s32 %s34, %s46
      %p112 = scmp.eq.s32.totalorder %s111, 0
      %s114 = sadd.s32 %s113, 1
      %s115 = scalar_select %p112, %s113, %s114
      %p118 = pneg %p112
      %p119 = scmp.eq.s32.totalorder %s27, 1
      %p120 = por %p118, %p119
      %p121 = scmp.ne.s32.totalorder %s113, %s116
      %p122 = scmp.eq.s32.totalorder %s27, 0
      %p123 = por %p121, %p122
      %p124 = scmp.ne.s32.totalorder %s113, %s116
      %p125 = scmp.eq.s32.totalorder %s32, 1
      %p126 = por %p124, %p125
      %p127 = scmp.ne.s32.totalorder %s116, %s117
      %p128 = scmp.eq.s32.totalorder %s32, 0
      %p129 = por %p127, %p128
      %p130 = scmp.ne.s32.totalorder %s116, %s117
      %p131 = scmp.eq.s32.totalorder %s33, 1
      %p132 = por %p130, %p131
      %p134 = scmp.ne.s32.totalorder %s117, %s133
      %p135 = scmp.eq.s32.totalorder %s33, 0
      %p136 = por %p134, %p135
      %s137 = ssub.s32 %s34, %s46
      %p138 = scmp.eq.s32.totalorder %s137, 0
      %s140 = sadd.s32 %s139, 1
      %s141 = scalar_select %p138, %s139, %s140
      %p144 = pneg %p138
      %p145 = scmp.eq.s32.totalorder %s27, 1
      %p146 = por %p144, %p145
      %p147 = scmp.ne.s32.totalorder %s139, %s142
      %p148 = scmp.eq.s32.totalorder %s27, 0
      %p149 = por %p147, %p148
      %p150 = scmp.ne.s32.totalorder %s139, %s142
      %p151 = scmp.eq.s32.totalorder %s32, 1
      %p152 = por %p150, %p151
      %p153 = scmp.ne.s32.totalorder %s142, %s143
      %p154 = scmp.eq.s32.totalorder %s32, 0
      %p155 = por %p153, %p154
      %p156 = scmp.ne.s32.totalorder %s142, %s143
      %p157 = scmp.eq.s32.totalorder %s33, 1
      %p158 = por %p156, %p157
      %p160 = scmp.ne.s32.totalorder %s143, %s159
      %p161 = scmp.eq.s32.totalorder %s33, 0
      %p162 = por %p160, %p161
      %s163 = ssub.s32 %s34, %s46
      %p164 = scmp.eq.s32.totalorder %s163, 0
      %s166 = sadd.s32 %s165, 1
      %s167 = scalar_select %p164, %s165, %s166
      %p170 = pneg %p164
      %p171 = scmp.eq.s32.totalorder %s27, 1
      %p172 = por %p170, %p171
      %p173 = scmp.ne.s32.totalorder %s165, %s168
      %p174 = scmp.eq.s32.totalorder %s27, 0
      %p175 = por %p173, %p174
      %p176 = scmp.ne.s32.totalorder %s165, %s168
      %p177 = scmp.eq.s32.totalorder %s32, 1
      %p178 = por %p176, %p177
      %p179 = scmp.ne.s32.totalorder %s168, %s169
      %p180 = scmp.eq.s32.totalorder %s32, 0
      %p181 = por %p179, %p180
      %p182 = scmp.ne.s32.totalorder %s168, %s169
      %p183 = scmp.eq.s32.totalorder %s33, 1
      %p184 = por %p182, %p183
      %p186 = scmp.ne.s32.totalorder %s169, %s185
      %p187 = scmp.eq.s32.totalorder %s33, 0
      %p188 = por %p186, %p187
      %s189 = ssub.s32 %s34, %s46
      %p190 = scmp.eq.s32.totalorder %s189, 0
      %s192 = sadd.s32 %s191, 1
      %s193 = scalar_select %p190, %s191, %s192
      %p196 = pneg %p190
      %p197 = scmp.eq.s32.totalorder %s27, 1
      %p198 = por %p196, %p197
      %p199 = scmp.ne.s32.totalorder %s191, %s194
      %p200 = scmp.eq.s32.totalorder %s27, 0
      %p201 = por %p199, %p200
      %p202 = scmp.ne.s32.totalorder %s191, %s194
      %p203 = scmp.eq.s32.totalorder %s32, 1
      %p204 = por %p202, %p203
      %p205 = scmp.ne.s32.totalorder %s194, %s195
      %p206 = scmp.eq.s32.totalorder %s32, 0
      %p207 = por %p205, %p206
      %p208 = scmp.ne.s32.totalorder %s194, %s195
      %p209 = scmp.eq.s32.totalorder %s33, 1
      %p210 = por %p208, %p209
      %p212 = scmp.ne.s32.totalorder %s195, %s211
      %p213 = scmp.eq.s32.totalorder %s33, 0
      %p214 = por %p212, %p213
      %p215 = scmp.le.s32.totalorder 1, %s27
      %p216 = scmp.lt.s32.totalorder %s27, 3
      %p217 = pnand %p215, %p216
      %p218 = pneg %p217
      // Predicated region
      $region9: #{tpu_custom_call.1} parent=5 // pred_check
        _
      $region10: #{tpu_custom_call.1} parent=5 // pred_check_branch
        %220 = sbr.rel (%p217) target = $region12
      $region11: #{tpu_custom_call.1} parent=5 // pred_region
        %s221 = ssub.s32 %s27, 1
      $region12: #{tpu_custom_call.1} parent=5 // pred_fallthru
        _
      %p222 = scmp.lt.s32.totalorder %s27, 2
      // Predicated region
      $region13: #{tpu_custom_call.1} parent=5 // pred_check
        %p223 = pneg %p222
      $region14: #{tpu_custom_call.1} parent=5 // pred_check_branch
        %225 = sbr.rel (%p223) target = $region16
      $region15: #{tpu_custom_call.1} parent=5 // pred_region
        // Predicated region
        $region17: #{tpu_custom_call.1} parent=15 // pred_check
          %p226 = pneg %p65
        $region18: #{tpu_custom_call.1} parent=15 // pred_check_branch
          %228 = sbr.rel (%p226) target = $region20
        $region19: #{tpu_custom_call.1} parent=15 // pred_region
          %s229 = sand.u32 %s55, 1
          %s230 = scalar_lea.sflag [#allocation3], %s229
          %s231 = sand.u32 %s55, 1
          %s232 = smul.addr %s231, 32
          %s233 = scalar_lea.vmem [#allocation2], %s232
          %s234 = sadd.s32 %s34, %s35
          %p235 = scmp.lt.s32.totalorder %s234, 0
          %s236 = scalar_select %p235, %s234, 0
          %s237 = smul.u32 4, %s236
          %239 = vsyncadd %s230, 0
          %s240 = smul.addr %s237, 8
          %s241 = scalar_lea.hbm %s0, %s240
          %s242 = sshll.u32 %s241, 4
          %s243 = int_to_ptr.hbm [resolvable:$true] %s242
          %s244 = sshll.u32 %s233, 4
          %s245 = int_to_ptr.vmem [resolvable:$true] %s244
          %250 = dma.hbm_to_vmem [thread:$0]  %s243, 512, %s245, %s230, 128, 128, 8
        $region20: #{tpu_custom_call.1} parent=15 // pred_fallthru
          _
        // Predicated region
        $region21: #{tpu_custom_call.1} parent=15 // pred_check
          %p251 = pneg %p97
        $region22: #{tpu_custom_call.1} parent=15 // pred_check_branch
          %253 = sbr.rel (%p251) target = $region24
        $region23: #{tpu_custom_call.1} parent=15 // pred_region
          %s254 = sand.u32 %s87, 1
          %s255 = scalar_lea.sflag [#allocation6], %s254
          %s256 = sand.u32 %s87, 1
          %s257 = smul.addr %s256, 32
          %s258 = scalar_lea.vmem [#allocation5], %s257
          %s259 = sadd.s32 %s34, %s35
          %p260 = scmp.lt.s32.totalorder %s259, 0
          %s261 = scalar_select %p260, %s259, 0
          %s262 = smul.u32 4, %s261
          %264 = vsyncadd %s255, 0
          %s265 = smul.addr %s262, 8
          %s266 = scalar_lea.hbm %s1, %s265
          %s267 = sshll.u32 %s266, 4
          %s268 = int_to_ptr.hbm [resolvable:$true] %s267
          %s269 = sshll.u32 %s258, 4
          %s270 = int_to_ptr.vmem [resolvable:$true] %s269
          %275 = dma.hbm_to_vmem [thread:$0]  %s268, 512, %s270, %s255, 128, 128, 8
        $region24: #{tpu_custom_call.1} parent=15 // pred_fallthru
          _
      $region16: #{tpu_custom_call.1} parent=5 // pred_fallthru
        _
      %p276 = scmp.le.s32.totalorder 1, %s27
      %p277 = scmp.lt.s32.totalorder %s27, 3
      %p278 = pnand %p276, %p277
      %p279 = pneg %p278
      // Predicated region
      $region25: #{tpu_custom_call.1} parent=5 // pred_check
        _
      $region26: #{tpu_custom_call.1} parent=5 // pred_check_branch
        %281 = sbr.rel (%p278) target = $region28
      $region27: #{tpu_custom_call.1} parent=5 // pred_region
        %s282 = ssub.s32 %s27, 1
        %s283 = sand.u32 %s58, 1
        %s284 = scalar_lea.sflag [#allocation3], %s283
        %s285 = sand.u32 %s58, 1
        %s286 = smul.addr %s285, 32
        %s287 = scalar_lea.vmem [#allocation2], %s286
        // Predicated region
        $region29: #{tpu_custom_call.1} parent=27 // pred_check
          %p288 = pneg %p71
        $region30: #{tpu_custom_call.1} parent=27 // pred_check_branch
          %290 = sbr.rel (%p288) target = $region32
        $region31: #{tpu_custom_call.1} parent=27 // pred_region
          %292 = dma.done %s284, 512
        $region32: #{tpu_custom_call.1} parent=27 // pred_fallthru
          _
        %s293 = sand.u32 %s90, 1
        %s294 = scalar_lea.sflag [#allocation6], %s293
        %s295 = sand.u32 %s90, 1
        %s296 = smul.addr %s295, 32
        %s297 = scalar_lea.vmem [#allocation5], %s296
        // Predicated region
        $region33: #{tpu_custom_call.1} parent=27 // pred_check
          %p298 = pneg %p103
        $region34: #{tpu_custom_call.1} parent=27 // pred_check_branch
          %300 = sbr.rel (%p298) target = $region36
        $region35: #{tpu_custom_call.1} parent=27 // pred_region
          %302 = dma.done %s294, 512
        $region36: #{tpu_custom_call.1} parent=27 // pred_fallthru
          _
        %s303 = sand.u32 %s58, 1
        %s304 = scalar_lea.sflag [#allocation3], %s303
        %s305 = sand.u32 %s58, 1
        %s306 = smul.addr %s305, 32
        %s307 = scalar_lea.vmem [#allocation2], %s306
        %p308 = pneg %p71
        %p309 = pneg %p68
        %s310 = sand.u32 %s90, 1
        %s311 = scalar_lea.sflag [#allocation6], %s310
        %s312 = sand.u32 %s90, 1
        %s313 = smul.addr %s312, 32
        %s314 = scalar_lea.vmem [#allocation5], %s313
        %p315 = pneg %p103
        %p316 = pneg %p100
        %p317 = pneg %p129
        %p318 = pneg %p126
        %s319 = sand.u32 %s116, 1
        %s320 = scalar_lea.sflag [#allocation4], %s319
        %s321 = sand.u32 %s116, 1
        %s322 = smul.addr %s321, 8
        %s323 = scalar_lea.vmem [#allocation7], %s322
        %p324 = pneg %p155
        %p325 = pneg %p152
        %s326 = sand.u32 %s32, 1
        %s327 = scalar_lea.sflag [#allocation9], %s326
        %s328 = sand.u32 %s142, 1
        %s329 = smul.addr %s328, 8
        %s330 = scalar_lea.vmem [#allocation8], %s329
        %p331 = pneg %p181
        %p332 = pneg %p178
        %s333 = sand.u32 %s32, 1
        %s334 = scalar_lea.sflag [#allocation9], %s333
        %s335 = sand.u32 %s168, 1
        %s336 = smul.addr %s335, 8
        %s337 = scalar_lea.vmem [#allocation10], %s336
        %p338 = pneg %p207
        %p339 = pneg %p204
        %s340 = sand.u32 %s194, 1
        %s341 = scalar_lea.sflag [#allocation12], %s340
        %s342 = sand.u32 %s194, 1
        %s343 = smul.addr %s342, 8
        %s344 = scalar_lea.vmem [#allocation11], %s343
        %s345 = sadd.s32 %s36, %s37
        %p346 = scmp.lt.s32.totalorder %s345, 0
        %s347 = scalar_select %p346, %s345, 0
        %s348 = smul.u32 4, %s347
        %s349 = sadd.s32 %s36, %s37
        %p350 = scmp.lt.s32.totalorder %s349, 0
        %s351 = scalar_select %p350, %s349, 0
        %s352 = smul.u32 4, %s351
        %p353 = scmp.eq.s32.totalorder %s37, 0
        // Predicated region
        $region37: #{tpu_custom_call.1} parent=27 // pred_check
          %p354 = pneg %p353
        $region38: #{tpu_custom_call.1} parent=27 // pred_check_branch
          %356 = sbr.rel (%p354) target = $region40
        $region39: #{tpu_custom_call.1} parent=27 // pred_region
          %357 = vst [vmem:[%s323] sm:$0xff] 0.0
          %358 = vst [vmem:[%s330] sm:$0xff] 0.0
          %359 = vst [vmem:[%s337] sm:$0xff] 0.0
          %360 = vst [vmem:[%s344] sm:$0xff] 0.0
        $region40: #{tpu_custom_call.1} parent=27 // pred_fallthru
          _
        %s361 = sadd.s32 %s36, %s37
        %s362 = smul.u32 %s361, 4096
        %v363 = vlaneseq
        %v364 = vshrl.u32 %v363, 7
        %v365 = vadd.s32 %v364, 8
        %v366 = vadd.s32 %v364, 16
        %v367 = vadd.s32 %v364, 24
        %v368 = vmul.u32 %v364, 128
        %v369 = vmul.u32 %v365, 128
        %v370 = vmul.u32 %v366, 128
        %v371 = vmul.u32 %v367, 128
        %v372 = vlaneseq
        %v373 = vand.u32 %v372, 127
        %v374 = vadd.s32 %v368, %v373
        %v375 = vadd.s32 %v369, %v373
        %v376 = vadd.s32 %v370, %v373
        %v377 = vadd.s32 %v371, %v373
        %s378 = sadd.s32 %s362, 4096
        %p379 = scmp.gt.s32.totalorder %s378, 512
        %p380 = scmp.le.s32.totalorder %s378, 512
        // Predicated region
        $region41: #{tpu_custom_call.1} parent=27 // pred_check
          %p381 = pneg %p380
        $region42: #{tpu_custom_call.1} parent=27 // pred_check_branch
          %383 = sbr.rel (%p381) target = $region44
        $region43: #{tpu_custom_call.1} parent=27 // pred_region
          %v384 = vld [vmem:[%s287] sm:$0xff]
          %v385 = vld [vmem:[%s287 + $0x8] sm:$0xff]
          %v386 = vld [vmem:[%s287 + $0x10] sm:$0xff]
          %v387 = vld [vmem:[%s287 + $0x18] sm:$0xff]
          %v388 = vld [vmem:[%s297] sm:$0xff]
          %v389 = vld [vmem:[%s297 + $0x8] sm:$0xff]
          %v390 = vld [vmem:[%s297 + $0x10] sm:$0xff]
          %v391 = vld [vmem:[%s297 + $0x18] sm:$0xff]
          %v392 = vand.u32 2147483647, %v384
          %v393 = vand.u32 2147483647, %v385
          %v394 = vand.u32 2147483647, %v386
          %v395 = vand.u32 2147483647, %v387
          %v396 = vsub.f32 0.0, %v392
          %v397 = vsub.f32 0.0, %v393
          %v398 = vsub.f32 0.0, %v394
          %v399 = vsub.f32 0.0, %v395
          %v400 = vmul.f32 %v396, 1.442695
          %v401 = vpow.pop %v400
          %v402 = vmul.f32 %v397, 1.442695
          %v403 = vpow.pop %v402
          %v404 = vmul.f32 %v398, 1.442695
          %v405 = vpow.pop %v404
          %v406 = vmul.f32 %v399, 1.442695
          %v407 = vpow.pop %v406
          %v408 = vadd.f32 %v401, 1.0
          %v409 = vadd.f32 %v403, 1.0
          %v410 = vadd.f32 %v405, 1.0
          %v411 = vadd.f32 %v407, 1.0
          %v412 = vrcp.pop %v408
          %v413 = vmul.f32 %v408, %v412
          %v414 = vsub.f32 1.0, %v413
          %v415 = vmul.f32 %v412, %v414
          %v416 = vadd.f32 %v412, %v415
          %vm417 = vweird.f32 %v408
          %vm418 = vweird.f32 %v412
          %vm419 = vmor %vm417, %vm418
          %v420 = vsel %vm419, %v412, %v416
          %v421 = vand.u32 2147483647, %v408
          %vm422 = vcmp.eq.f32.partialorder %v421, 8.507059e+37
          %v423 = vand.u32 %v408, 2147483648
          %v424 = vor.u32 1.1754944e-38, %v423
          %v425 = vsel %vm422, %v424, %v420
          %v426 = vmul.f32 1.0, %v425
          %v427 = vrcp.pop %v409
          %v428 = vmul.f32 %v409, %v427
          %v429 = vsub.f32 1.0, %v428
          %v430 = vmul.f32 %v427, %v429
          %v431 = vadd.f32 %v427, %v430
          %vm432 = vweird.f32 %v409
          %vm433 = vweird.f32 %v427
          %vm434 = vmor %vm432, %vm433
          %v435 = vsel %vm434, %v427, %v431
          %v436 = vand.u32 2147483647, %v409
          %vm437 = vcmp.eq.f32.partialorder %v436, 8.507059e+37
          %v438 = vand.u32 %v409, 2147483648
          %v439 = vor.u32 1.1754944e-38, %v438
          %v440 = vsel %vm437, %v439, %v435
          %v441 = vmul.f32 1.0, %v440
          %v442 = vrcp.pop %v410
          %v443 = vmul.f32 %v410, %v442
          %v444 = vsub.f32 1.0, %v443
          %v445 = vmul.f32 %v442, %v444
          %v446 = vadd.f32 %v442, %v445
          %vm447 = vweird.f32 %v410
          %vm448 = vweird.f32 %v442
          %vm449 = vmor %vm447, %vm448
          %v450 = vsel %vm449, %v442, %v446
          %v451 = vand.u32 2147483647, %v410
          %vm452 = vcmp.eq.f32.partialorder %v451, 8.507059e+37
          %v453 = vand.u32 %v410, 2147483648
          %v454 = vor.u32 1.1754944e-38, %v453
          %v455 = vsel %vm452, %v454, %v450
          %v456 = vmul.f32 1.0, %v455
          %v457 = vrcp.pop %v411
          %v458 = vmul.f32 %v411, %v457
          %v459 = vsub.f32 1.0, %v458
          %v460 = vmul.f32 %v457, %v459
          %v461 = vadd.f32 %v457, %v460
          %vm462 = vweird.f32 %v411
          %vm463 = vweird.f32 %v457
          %vm464 = vmor %vm462, %vm463
          %v465 = vsel %vm464, %v457, %v461
          %v466 = vand.u32 2147483647, %v411
          %vm467 = vcmp.eq.f32.partialorder %v466, 8.507059e+37
          %v468 = vand.u32 %v411, 2147483648
          %v469 = vor.u32 1.1754944e-38, %v468
          %v470 = vsel %vm467, %v469, %v465
          %v471 = vmul.f32 1.0, %v470
          %vm472 = vcmp.ge.f32.partialorder %v384, 0.0
          %vm473 = vcmp.ge.f32.partialorder %v385, 0.0
          %vm474 = vcmp.ge.f32.partialorder %v386, 0.0
          %vm475 = vcmp.ge.f32.partialorder %v387, 0.0
          %v476 = vsub.f32 1.0, %v426
          %v477 = vsub.f32 1.0, %v441
          %v478 = vsub.f32 1.0, %v456
          %v479 = vsub.f32 1.0, %v471
          %v480 = vsel %vm472, %v426, %v476
          %v481 = vsel %vm473, %v441, %v477
          %v482 = vsel %vm474, %v456, %v478
          %v483 = vsel %vm475, %v471, %v479
          %v484 = vmin.f32 %v384, 0.0
          %v485 = vmin.f32 %v385, 0.0
          %v486 = vmin.f32 %v386, 0.0
          %v487 = vmin.f32 %v387, 0.0
          %v488 = vlog2.pop %v408
          %v489 = vmul.f32 %v488, 0.6931472
          %v490 = vlog2.pop %v409
          %v491 = vmul.f32 %v490, 0.6931472
          %v492 = vlog2.pop %v410
          %v493 = vmul.f32 %v492, 0.6931472
          %v494 = vlog2.pop %v411
          %v495 = vmul.f32 %v494, 0.6931472
          %v496 = vsub.f32 %v484, %v489
          %v497 = vsub.f32 %v485, %v491
          %v498 = vsub.f32 %v486, %v493
          %v499 = vsub.f32 %v487, %v495
          %v500 = vsub.f32 %v496, %v384
          %v501 = vsub.f32 %v497, %v385
          %v502 = vsub.f32 %v498, %v386
          %v503 = vsub.f32 %v499, %v387
          %v504 = vsub.f32 1.0, %v480
          %v505 = vsub.f32 1.0, %v481
          %v506 = vsub.f32 1.0, %v482
          %v507 = vsub.f32 1.0, %v483
          %v508 = vmul.f32 %v504, %v504
          %v509 = vmul.f32 %v505, %v505
          %v510 = vmul.f32 %v506, %v506
          %v511 = vmul.f32 %v507, %v507
          %v512 = vmul.f32 %v480, %v480
          %v513 = vmul.f32 %v481, %v481
          %v514 = vmul.f32 %v482, %v482
          %v515 = vmul.f32 %v483, %v483
          %v516 = vmul.f32 %v388, 0.25
          %v517 = vmul.f32 %v389, 0.25
          %v518 = vmul.f32 %v390, 0.25
          %v519 = vmul.f32 %v391, 0.25
          %v520 = vmul.f32 %v516, %v508
          %v521 = vmul.f32 %v517, %v509
          %v522 = vmul.f32 %v518, %v510
          %v523 = vmul.f32 %v519, %v511
          %v524 = vmul.f32 %v520, %v496
          %v525 = vmul.f32 %v521, %v497
          %v526 = vmul.f32 %v522, %v498
          %v527 = vmul.f32 %v523, %v499
          %v528 = vsub.f32 1.0, %v388
          %v529 = vsub.f32 1.0, %v389
          %v530 = vsub.f32 1.0, %v390
          %v531 = vsub.f32 1.0, %v391
          %v532 = vmul.f32 %v528, 0.75
          %v533 = vmul.f32 %v529, 0.75
          %v534 = vmul.f32 %v530, 0.75
          %v535 = vmul.f32 %v531, 0.75
          %v536 = vmul.f32 %v532, %v512
          %v537 = vmul.f32 %v533, %v513
          %v538 = vmul.f32 %v534, %v514
          %v539 = vmul.f32 %v535, %v515
          %v540 = vmul.f32 %v536, %v500
          %v541 = vmul.f32 %v537, %v501
          %v542 = vmul.f32 %v538, %v502
          %v543 = vmul.f32 %v539, %v503
          %v544 = vadd.f32 %v524, %v540
          %v545 = vadd.f32 %v525, %v541
          %v546 = vadd.f32 %v526, %v542
          %v547 = vadd.f32 %v527, %v543
          %v548 = vsub.f32 0.0, %v544
          %v549 = vsub.f32 0.0, %v545
          %v550 = vsub.f32 0.0, %v546
          %v551 = vsub.f32 0.0, %v547
          %v552 = vmul.f32 %v480, %v388
          %v553 = vmul.f32 %v481, %v389
          %v554 = vmul.f32 %v482, %v390
          %v555 = vmul.f32 %v483, %v391
          %v556 = vadd.f32 %v552, %v553
          %v557 = vadd.f32 %v556, %v554
          %v558 = vadd.f32 %v557, %v555
          %v559 = vadd.f32 %v558, 0.0
          %v560 = vadd.f32 %v480, %v481
          %v561 = vadd.f32 %v560, %v482
          %v562 = vadd.f32 %v561, %v483
          %v563 = vadd.f32 %v562, 0.0
          %v564 = vadd.f32 %v388, %v389
          %v565 = vadd.f32 %v564, %v390
          %v566 = vadd.f32 %v565, %v391
          %v567 = vadd.f32 %v566, 0.0
          %v568 = vadd.f32 %v548, %v549
          %v569 = vadd.f32 %v568, %v550
          %v570 = vadd.f32 %v569, %v551
          %v571 = vadd.f32 %v570, 0.0
          %v572 = vld [vmem:[%s323] sm:$0xff]
          %v573 = vadd.f32 %v572, %v559
          %574 = vst [vmem:[%s323] sm:$0xff] %v573
          %v575 = vld [vmem:[%s330] sm:$0xff]
          %v576 = vadd.f32 %v575, %v563
          %577 = vst [vmem:[%s330] sm:$0xff] %v576
          %v578 = vld [vmem:[%s337] sm:$0xff]
          %v579 = vadd.f32 %v578, %v567
          %580 = vst [vmem:[%s337] sm:$0xff] %v579
          %v581 = vld [vmem:[%s344] sm:$0xff]
          %v582 = vadd.f32 %v581, %v571
          %583 = vst [vmem:[%s344] sm:$0xff] %v582
        $region44: #{tpu_custom_call.1} parent=27 // pred_fallthru
          _
        // Predicated region
        $region45: #{tpu_custom_call.1} parent=27 // pred_check
          %p584 = pneg %p379
        $region46: #{tpu_custom_call.1} parent=27 // pred_check_branch
          %586 = sbr.rel (%p584) target = $region48
        $region47: #{tpu_custom_call.1} parent=27 // pred_region
          %v587 = vld [vmem:[%s287] sm:$0xff]
          %v588 = vld [vmem:[%s287 + $0x8] sm:$0xff]
          %v589 = vld [vmem:[%s287 + $0x10] sm:$0xff]
          %v590 = vld [vmem:[%s287 + $0x18] sm:$0xff]
          %v591 = vld [vmem:[%s297] sm:$0xff]
          %v592 = vld [vmem:[%s297 + $0x8] sm:$0xff]
          %v593 = vld [vmem:[%s297 + $0x10] sm:$0xff]
          %v594 = vld [vmem:[%s297 + $0x18] sm:$0xff]
          %s595 = ssub.s32 512, %s362
          %v596 = vstv %s595
          %vm597 = vcmp.lt.s32.totalorder %v374, %v596
          %vm598 = vcmp.lt.s32.totalorder %v375, %v596
          %vm599 = vcmp.lt.s32.totalorder %v376, %v596
          %vm600 = vcmp.lt.s32.totalorder %v377, %v596
          %v601 = vsel %vm597, %v587, 0.0
          %v602 = vsel %vm598, %v588, 0.0
          %v603 = vsel %vm599, %v589, 0.0
          %v604 = vsel %vm600, %v590, 0.0
          %v605 = vsel %vm597, %v591, 0.0
          %v606 = vsel %vm598, %v592, 0.0
          %v607 = vsel %vm599, %v593, 0.0
          %v608 = vsel %vm600, %v594, 0.0
          %v609 = vand.u32 2147483647, %v601
          %v610 = vand.u32 2147483647, %v602
          %v611 = vand.u32 2147483647, %v603
          %v612 = vand.u32 2147483647, %v604
          %v613 = vsub.f32 0.0, %v609
          %v614 = vsub.f32 0.0, %v610
          %v615 = vsub.f32 0.0, %v611
          %v616 = vsub.f32 0.0, %v612
          %v617 = vmul.f32 %v613, 1.442695
          %v618 = vpow.pop %v617
          %v619 = vmul.f32 %v614, 1.442695
          %v620 = vpow.pop %v619
          %v621 = vmul.f32 %v615, 1.442695
          %v622 = vpow.pop %v621
          %v623 = vmul.f32 %v616, 1.442695
          %v624 = vpow.pop %v623
          %v625 = vadd.f32 %v618, 1.0
          %v626 = vadd.f32 %v620, 1.0
          %v627 = vadd.f32 %v622, 1.0
          %v628 = vadd.f32 %v624, 1.0
          %v629 = vrcp.pop %v625
          %v630 = vmul.f32 %v625, %v629
          %v631 = vsub.f32 1.0, %v630
          %v632 = vmul.f32 %v629, %v631
          %v633 = vadd.f32 %v629, %v632
          %vm634 = vweird.f32 %v625
          %vm635 = vweird.f32 %v629
          %vm636 = vmor %vm634, %vm635
          %v637 = vsel %vm636, %v629, %v633
          %v638 = vand.u32 2147483647, %v625
          %vm639 = vcmp.eq.f32.partialorder %v638, 8.507059e+37
          %v640 = vand.u32 %v625, 2147483648
          %v641 = vor.u32 1.1754944e-38, %v640
          %v642 = vsel %vm639, %v641, %v637
          %v643 = vmul.f32 1.0, %v642
          %v644 = vrcp.pop %v626
          %v645 = vmul.f32 %v626, %v644
          %v646 = vsub.f32 1.0, %v645
          %v647 = vmul.f32 %v644, %v646
          %v648 = vadd.f32 %v644, %v647
          %vm649 = vweird.f32 %v626
          %vm650 = vweird.f32 %v644
          %vm651 = vmor %vm649, %vm650
          %v652 = vsel %vm651, %v644, %v648
          %v653 = vand.u32 2147483647, %v626
          %vm654 = vcmp.eq.f32.partialorder %v653, 8.507059e+37
          %v655 = vand.u32 %v626, 2147483648
          %v656 = vor.u32 1.1754944e-38, %v655
          %v657 = vsel %vm654, %v656, %v652
          %v658 = vmul.f32 1.0, %v657
          %v659 = vrcp.pop %v627
          %v660 = vmul.f32 %v627, %v659
          %v661 = vsub.f32 1.0, %v660
          %v662 = vmul.f32 %v659, %v661
          %v663 = vadd.f32 %v659, %v662
          %vm664 = vweird.f32 %v627
          %vm665 = vweird.f32 %v659
          %vm666 = vmor %vm664, %vm665
          %v667 = vsel %vm666, %v659, %v663
          %v668 = vand.u32 2147483647, %v627
          %vm669 = vcmp.eq.f32.partialorder %v668, 8.507059e+37
          %v670 = vand.u32 %v627, 2147483648
          %v671 = vor.u32 1.1754944e-38, %v670
          %v672 = vsel %vm669, %v671, %v667
          %v673 = vmul.f32 1.0, %v672
          %v674 = vrcp.pop %v628
          %v675 = vmul.f32 %v628, %v674
          %v676 = vsub.f32 1.0, %v675
          %v677 = vmul.f32 %v674, %v676
          %v678 = vadd.f32 %v674, %v677
          %vm679 = vweird.f32 %v628
          %vm680 = vweird.f32 %v674
          %vm681 = vmor %vm679, %vm680
          %v682 = vsel %vm681, %v674, %v678
          %v683 = vand.u32 2147483647, %v628
          %vm684 = vcmp.eq.f32.partialorder %v683, 8.507059e+37
          %v685 = vand.u32 %v628, 2147483648
          %v686 = vor.u32 1.1754944e-38, %v685
          %v687 = vsel %vm684, %v686, %v682
          %v688 = vmul.f32 1.0, %v687
          %vm689 = vcmp.ge.f32.partialorder %v601, 0.0
          %vm690 = vcmp.ge.f32.partialorder %v602, 0.0
          %vm691 = vcmp.ge.f32.partialorder %v603, 0.0
          %vm692 = vcmp.ge.f32.partialorder %v604, 0.0
          %v693 = vsub.f32 1.0, %v643
          %v694 = vsub.f32 1.0, %v658
          %v695 = vsub.f32 1.0, %v673
          %v696 = vsub.f32 1.0, %v688
          %v697 = vsel %vm689, %v643, %v693
          %v698 = vsel %vm690, %v658, %v694
          %v699 = vsel %vm691, %v673, %v695
          %v700 = vsel %vm692, %v688, %v696
          %v701 = vmin.f32 %v601, 0.0
          %v702 = vmin.f32 %v602, 0.0
          %v703 = vmin.f32 %v603, 0.0
          %v704 = vmin.f32 %v604, 0.0
          %v705 = vlog2.pop %v625
          %v706 = vmul.f32 %v705, 0.6931472
          %v707 = vlog2.pop %v626
          %v708 = vmul.f32 %v707, 0.6931472
          %v709 = vlog2.pop %v627
          %v710 = vmul.f32 %v709, 0.6931472
          %v711 = vlog2.pop %v628
          %v712 = vmul.f32 %v711, 0.6931472
          %v713 = vsub.f32 %v701, %v706
          %v714 = vsub.f32 %v702, %v708
          %v715 = vsub.f32 %v703, %v710
          %v716 = vsub.f32 %v704, %v712
          %v717 = vsub.f32 %v713, %v601
          %v718 = vsub.f32 %v714, %v602
          %v719 = vsub.f32 %v715, %v603
          %v720 = vsub.f32 %v716, %v604
          %v721 = vsub.f32 1.0, %v697
          %v722 = vsub.f32 1.0, %v698
          %v723 = vsub.f32 1.0, %v699
          %v724 = vsub.f32 1.0, %v700
          %v725 = vmul.f32 %v721, %v721
          %v726 = vmul.f32 %v722, %v722
          %v727 = vmul.f32 %v723, %v723
          %v728 = vmul.f32 %v724, %v724
          %v729 = vmul.f32 %v697, %v697
          %v730 = vmul.f32 %v698, %v698
          %v731 = vmul.f32 %v699, %v699
          %v732 = vmul.f32 %v700, %v700
          %v733 = vmul.f32 %v605, 0.25
          %v734 = vmul.f32 %v606, 0.25
          %v735 = vmul.f32 %v607, 0.25
          %v736 = vmul.f32 %v608, 0.25
          %v737 = vmul.f32 %v733, %v725
          %v738 = vmul.f32 %v734, %v726
          %v739 = vmul.f32 %v735, %v727
          %v740 = vmul.f32 %v736, %v728
          %v741 = vmul.f32 %v737, %v713
          %v742 = vmul.f32 %v738, %v714
          %v743 = vmul.f32 %v739, %v715
          %v744 = vmul.f32 %v740, %v716
          %v745 = vsub.f32 1.0, %v605
          %v746 = vsub.f32 1.0, %v606
          %v747 = vsub.f32 1.0, %v607
          %v748 = vsub.f32 1.0, %v608
          %v749 = vmul.f32 %v745, 0.75
          %v750 = vmul.f32 %v746, 0.75
          %v751 = vmul.f32 %v747, 0.75
          %v752 = vmul.f32 %v748, 0.75
          %v753 = vmul.f32 %v749, %v729
          %v754 = vmul.f32 %v750, %v730
          %v755 = vmul.f32 %v751, %v731
          %v756 = vmul.f32 %v752, %v732
          %v757 = vmul.f32 %v753, %v717
          %v758 = vmul.f32 %v754, %v718
          %v759 = vmul.f32 %v755, %v719
          %v760 = vmul.f32 %v756, %v720
          %v761 = vadd.f32 %v741, %v757
          %v762 = vadd.f32 %v742, %v758
          %v763 = vadd.f32 %v743, %v759
          %v764 = vadd.f32 %v744, %v760
          %v765 = vsub.f32 0.0, %v761
          %v766 = vsub.f32 0.0, %v762
          %v767 = vsub.f32 0.0, %v763
          %v768 = vsub.f32 0.0, %v764
          %v769 = vsel %vm597, %v697, 0.0
          %v770 = vsel %vm598, %v698, 0.0
          %v771 = vsel %vm599, %v699, 0.0
          %v772 = vsel %vm600, %v700, 0.0
          %v773 = vsel %vm597, %v765, 0.0
          %v774 = vsel %vm598, %v766, 0.0
          %v775 = vsel %vm599, %v767, 0.0
          %v776 = vsel %vm600, %v768, 0.0
          %v777 = vmul.f32 %v769, %v605
          %v778 = vmul.f32 %v770, %v606
          %v779 = vmul.f32 %v771, %v607
          %v780 = vmul.f32 %v772, %v608
          %v781 = vadd.f32 %v777, %v778
          %v782 = vadd.f32 %v781, %v779
          %v783 = vadd.f32 %v782, %v780
          %v784 = vadd.f32 %v783, 0.0
          %v785 = vadd.f32 %v769, %v770
          %v786 = vadd.f32 %v785, %v771
          %v787 = vadd.f32 %v786, %v772
          %v788 = vadd.f32 %v787, 0.0
          %v789 = vadd.f32 %v605, %v606
          %v790 = vadd.f32 %v789, %v607
          %v791 = vadd.f32 %v790, %v608
          %v792 = vadd.f32 %v791, 0.0
          %v793 = vadd.f32 %v773, %v774
          %v794 = vadd.f32 %v793, %v775
          %v795 = vadd.f32 %v794, %v776
          %v796 = vadd.f32 %v795, 0.0
          %v797 = vld [vmem:[%s323] sm:$0xff]
          %v798 = vadd.f32 %v797, %v784
          %799 = vst [vmem:[%s323] sm:$0xff] %v798
          %v800 = vld [vmem:[%s330] sm:$0xff]
          %v801 = vadd.f32 %v800, %v788
          %802 = vst [vmem:[%s330] sm:$0xff] %v801
          %v803 = vld [vmem:[%s337] sm:$0xff]
          %v804 = vadd.f32 %v803, %v792
          %805 = vst [vmem:[%s337] sm:$0xff] %v804
          %v806 = vld [vmem:[%s344] sm:$0xff]
          %v807 = vadd.f32 %v806, %v796
          %808 = vst [vmem:[%s344] sm:$0xff] %v807
        $region48: #{tpu_custom_call.1} parent=27 // pred_fallthru
          _
        %s809 = sand.u32 %s116, 1
        %s810 = scalar_lea.sflag [#allocation4], %s809
        %s811 = sand.u32 %s116, 1
        %s812 = smul.addr %s811, 8
        %s813 = scalar_lea.vmem [#allocation7], %s812
        %s814 = sand.u32 %s32, 1
        %s815 = scalar_lea.sflag [#allocation9], %s814
        %s816 = sand.u32 %s142, 1
        %s817 = smul.addr %s816, 8
        %s818 = scalar_lea.vmem [#allocation8], %s817
        %s819 = sand.u32 %s32, 1
        %s820 = scalar_lea.sflag [#allocation9], %s819
        %s821 = sand.u32 %s168, 1
        %s822 = smul.addr %s821, 8
        %s823 = scalar_lea.vmem [#allocation10], %s822
        %s824 = sand.u32 %s194, 1
        %s825 = scalar_lea.sflag [#allocation12], %s824
        %s826 = sand.u32 %s194, 1
        %s827 = smul.addr %s826, 8
        %s828 = scalar_lea.vmem [#allocation11], %s827
        // Predicated region
        $region49: #{tpu_custom_call.1} parent=27 // pred_check
          %p829 = pneg %p126
        $region50: #{tpu_custom_call.1} parent=27 // pred_check_branch
          %831 = sbr.rel (%p829) target = $region52
        $region51: #{tpu_custom_call.1} parent=27 // pred_region
          %833 = vsyncadd %s810, 0
          %s834 = smul.addr %s36, 8
          %s835 = scalar_lea.hbm %s2, %s834
          %s837 = sshll.u32 %s813, 4
          %s838 = int_to_ptr.vmem [resolvable:$true] %s837
          %s839 = sshll.u32 %s835, 4
          %s840 = int_to_ptr.hbm [resolvable:$true] %s839
          %842 = dma.vmem_to_hbm [thread:$0]  %s838, 128, %s840, %s810
        $region52: #{tpu_custom_call.1} parent=27 // pred_fallthru
          _
        // Predicated region
        $region53: #{tpu_custom_call.1} parent=27 // pred_check
          %p843 = pneg %p152
        $region54: #{tpu_custom_call.1} parent=27 // pred_check_branch
          %845 = sbr.rel (%p843) target = $region56
        $region55: #{tpu_custom_call.1} parent=27 // pred_region
          %847 = vsyncadd %s815, 0
          %s848 = smul.addr %s36, 8
          %s849 = scalar_lea.hbm %s3, %s848
          %s851 = sshll.u32 %s818, 4
          %s852 = int_to_ptr.vmem [resolvable:$true] %s851
          %s853 = sshll.u32 %s849, 4
          %s854 = int_to_ptr.hbm [resolvable:$true] %s853
          %856 = dma.vmem_to_hbm [thread:$0]  %s852, 128, %s854, %s815
        $region56: #{tpu_custom_call.1} parent=27 // pred_fallthru
          _
        // Predicated region
        $region57: #{tpu_custom_call.1} parent=27 // pred_check
          %p857 = pneg %p178
        $region58: #{tpu_custom_call.1} parent=27 // pred_check_branch
          %859 = sbr.rel (%p857) target = $region60
        $region59: #{tpu_custom_call.1} parent=27 // pred_region
          %861 = vsyncadd %s820, 0
          %s862 = smul.addr %s36, 8
          %s863 = scalar_lea.hbm %s4, %s862
          %s865 = sshll.u32 %s823, 4
          %s866 = int_to_ptr.vmem [resolvable:$true] %s865
          %s867 = sshll.u32 %s863, 4
          %s868 = int_to_ptr.hbm [resolvable:$true] %s867
          %870 = dma.vmem_to_hbm [thread:$0]  %s866, 128, %s868, %s820
        $region60: #{tpu_custom_call.1} parent=27 // pred_fallthru
          _
        // Predicated region
        $region61: #{tpu_custom_call.1} parent=27 // pred_check
          %p871 = pneg %p204
        $region62: #{tpu_custom_call.1} parent=27 // pred_check_branch
          %873 = sbr.rel (%p871) target = $region64
        $region63: #{tpu_custom_call.1} parent=27 // pred_region
          %875 = vsyncadd %s825, 0
          %s876 = smul.addr %s36, 8
          %s877 = scalar_lea.hbm %s5, %s876
          %s879 = sshll.u32 %s828, 4
          %s880 = int_to_ptr.vmem [resolvable:$true] %s879
          %s881 = sshll.u32 %s877, 4
          %s882 = int_to_ptr.hbm [resolvable:$true] %s881
          %884 = dma.vmem_to_hbm [thread:$0]  %s880, 128, %s882, %s825
        $region64: #{tpu_custom_call.1} parent=27 // pred_fallthru
          _
      $region28: #{tpu_custom_call.1} parent=5 // pred_fallthru
        _
      %p885 = scmp.le.s32.totalorder 2, %s27
      // Predicated region
      $region65: #{tpu_custom_call.1} parent=5 // pred_check
        %p886 = pneg %p885
      $region66: #{tpu_custom_call.1} parent=5 // pred_check_branch
        %888 = sbr.rel (%p886) target = $region68
      $region67: #{tpu_custom_call.1} parent=5 // pred_region
        %s889 = ssub.s32 %s27, 2
        // Predicated region
        $region69: #{tpu_custom_call.1} parent=67 // pred_check
          %p890 = pneg %p132
        $region70: #{tpu_custom_call.1} parent=67 // pred_check_branch
          %892 = sbr.rel (%p890) target = $region72
        $region71: #{tpu_custom_call.1} parent=67 // pred_region
          %s893 = sand.u32 %s117, 1
          %s894 = scalar_lea.sflag [#allocation4], %s893
          %s895 = sand.u32 %s117, 1
          %s896 = smul.addr %s895, 8
          %s897 = scalar_lea.vmem [#allocation7], %s896
          %899 = dma.done %s894, 128
        $region72: #{tpu_custom_call.1} parent=67 // pred_fallthru
          _
        // Predicated region
        $region73: #{tpu_custom_call.1} parent=67 // pred_check
          %p900 = pneg %p158
        $region74: #{tpu_custom_call.1} parent=67 // pred_check_branch
          %902 = sbr.rel (%p900) target = $region76
        $region75: #{tpu_custom_call.1} parent=67 // pred_region
          %s903 = sand.u32 %s33, 1
          %s904 = scalar_lea.sflag [#allocation9], %s903
          %s905 = sand.u32 %s143, 1
          %s906 = smul.addr %s905, 8
          %s907 = scalar_lea.vmem [#allocation8], %s906
          %909 = dma.done %s904, 128
        $region76: #{tpu_custom_call.1} parent=67 // pred_fallthru
          _
        // Predicated region
        $region77: #{tpu_custom_call.1} parent=67 // pred_check
          %p910 = pneg %p184
        $region78: #{tpu_custom_call.1} parent=67 // pred_check_branch
          %912 = sbr.rel (%p910) target = $region80
        $region79: #{tpu_custom_call.1} parent=67 // pred_region
          %s913 = sand.u32 %s33, 1
          %s914 = scalar_lea.sflag [#allocation9], %s913
          %s915 = sand.u32 %s169, 1
          %s916 = smul.addr %s915, 8
          %s917 = scalar_lea.vmem [#allocation10], %s916
          %919 = dma.done %s914, 128
        $region80: #{tpu_custom_call.1} parent=67 // pred_fallthru
          _
        // Predicated region
        $region81: #{tpu_custom_call.1} parent=67 // pred_check
          %p920 = pneg %p210
        $region82: #{tpu_custom_call.1} parent=67 // pred_check_branch
          %922 = sbr.rel (%p920) target = $region84
        $region83: #{tpu_custom_call.1} parent=67 // pred_region
          %s923 = sand.u32 %s195, 1
          %s924 = scalar_lea.sflag [#allocation12], %s923
          %s925 = sand.u32 %s195, 1
          %s926 = smul.addr %s925, 8
          %s927 = scalar_lea.vmem [#allocation11], %s926
          %929 = dma.done %s924, 128
        $region84: #{tpu_custom_call.1} parent=67 // pred_fallthru
          _
      $region68: #{tpu_custom_call.1} parent=5 // pred_fallthru
        _
    $region6: #{tpu_custom_call.1} parent=1 // loop_footer
      %s31 = sadd.s32 1, %s27
    $region7: #{tpu_custom_call.1} parent=1 // loop_footer_branch
      %26 = sbr.rel target = $region3
    $region8: #{tpu_custom_call.1} parent=1 // loop_exit
      _
    %930 = vsyncpa [#allocation3], 1
    %s931 = scalar_lea.sflag [#allocation3], 1
    %932 = vsyncpa %s931, 1
    %933 = vsyncpa [#allocation6], 1
    %s934 = scalar_lea.sflag [#allocation6], 1
    %935 = vsyncpa %s934, 1
    %936 = vsyncpa [#allocation4], 1
    %s937 = scalar_lea.sflag [#allocation4], 1
    %938 = vsyncpa %s937, 1
    %939 = vsyncpa [#allocation9], 1
    %s940 = scalar_lea.sflag [#allocation9], 1
    %941 = vsyncpa %s940, 1
    %942 = vsyncpa [#allocation12], 1
    %s943 = scalar_lea.sflag [#allocation12], 1
    %944 = vsyncpa %s943, 1

</llo_original>
